<compile_context>
chip_gen: v7x
topology: tpu7x:2x2x1
jax: 0.10.0
libtpu: 0.0.40
codegen_flags: <defaults>
</compile_context>

<pallas_src>
import functools
import math

import jax
import jax.numpy as jnp
from jax.experimental import pallas as pl
from jax.experimental.pallas import tpu as pltpu


def _norm_kernel(x_ref, alpha_ref, bias_ref, o_ref, *, eps, d_model):
    # x_ref: (TILE_ROWS, d_model); alpha/bias: (1, d_model)
    x = x_ref[...].astype(jnp.float32)
    mean = jnp.mean(x, axis=-1, keepdims=True)
    xc = x - mean
    # torch.std default: unbiased estimator (divide by N-1); eps added to std.
    # Guard d_model == 1 (torch would give NaN there; we just avoid a /0 constant).
    denom = max(d_model - 1, 1)
    var = jnp.sum(xc * xc, axis=-1, keepdims=True) * jnp.float32(1.0 / denom)
    std = jnp.sqrt(var)
    # Exact divide (only on a (rows, 1) column): free at this arithmetic
    # intensity and tighter vs the torch reference than approx reciprocal.
    inv = jnp.float32(1.0) / (std + jnp.float32(eps))
    alpha = alpha_ref[...].astype(jnp.float32)
    bias = bias_ref[...].astype(jnp.float32)
    o_ref[...] = (xc * (alpha * inv) + bias).astype(o_ref.dtype)


def _vmem_capacity_bytes():
    # Trace-time hardware query; fall back to the smallest per-TC VMEM (v7x).
    try:
        return int(pltpu.get_tpu_info().vmem_capacity_bytes)
    except Exception:
        return 64 * 1024 * 1024


def _choose_tile_rows(rows, d_model, itemsize, pack):
    row_bytes = d_model * itemsize
    capacity = _vmem_capacity_bytes()
    # Pipeline-buffer budget: roomier on 128 MiB parts (v5e/v6e), tighter on
    # v7x's 64 MiB/TC.  per_row accounts for in+out double-buffering (4 blocks)
    # plus ~2 tile-sized f32 upcast intermediates inside the kernel.
    budget = (56 << 20) if capacity >= (100 << 20) else (32 << 20)
    per_row = 4 * row_bytes + 2 * d_model * 4
    # Block-byte target (~8 MiB per I/O block), not a row-count cap.
    target_block_bytes = 8 << 20
    t = target_block_bytes // max(row_bytes, 1)
    t = min(t, budget // max(per_row, 1))
    # Keep >= 2 grid steps when there is enough work for two >= 1 MiB blocks,
    # so v7x's second TensorCore gets a share (no-op on single-TC v5e/v6e).
    half_rows = (rows + 1) // 2
    half = ((half_rows + pack - 1) // pack) * pack
    if half * row_bytes >= (1 << 20):
        t = min(t, half)
    t = max(pack, (t // pack) * pack)
    return int(t)


def norm_forward(x, alpha, bias, eps=1e-6, tile_rows=None):
    """x: (..., d_model); alpha, bias: (d_model,)."""
    orig_shape = x.shape
    d_model = int(orig_shape[-1])
    rows = int(math.prod(orig_shape[:-1])) if len(orig_shape) > 1 else 1
    x2 = x.reshape(rows, d_model)
    alpha2 = alpha.reshape(1, d_model)
    bias2 = bias.reshape(1, d_model)

    itemsize = jnp.dtype(x.dtype).itemsize
    pack = 8 * max(1, 4 // itemsize)  # sublane packing: 8 (f32), 16 (bf16), 32 (i8)
    if tile_rows is None:
        tile_rows = _choose_tile_rows(rows, d_model, itemsize, pack)
    else:
        tile_rows = max(pack, (int(tile_rows) // pack) * pack)

    num_tiles = -(-rows // tile_rows)
    if num_tiles == 1:
        # Single tile: block == full array dim is always a legal block shape,
        # no ragged edge handling needed at all.
        tile_rows = rows
    # num_tiles > 1 with rows % tile_rows != 0: the last block is ragged and
    # handled by Pallas (OOB reads are unspecified-but-harmless per-row, OOB
    # writes are dropped).  No wrapper pad, no output slice -> 1 read + 1 write.

    kernel = functools.partial(_norm_kernel, eps=float(eps), d_model=d_model)

    # Explicit scoped-VMEM limit: 4 double-buffered I/O blocks + ~2 tile-sized
    # f32 intermediates + headroom, capped below physical per-TC VMEM.
    block_bytes = tile_rows * d_model * itemsize
    f32_tmp_bytes = 2 * tile_rows * d_model * 4
    capacity = _vmem_capacity_bytes()
    need = 4 * block_bytes + f32_tmp_bytes + (4 << 20)
    vmem_limit = int(max(16 << 20, min(need, capacity - (8 << 20))))

    out2 = pl.pallas_call(
        kernel,
        out_shape=jax.ShapeDtypeStruct((rows, d_model), x.dtype),
        grid_spec=pltpu.PrefetchScalarGridSpec(
            num_scalar_prefetch=0,
            grid=(num_tiles,),
            in_specs=[
                pl.BlockSpec((tile_rows, d_model), lambda i: (i, 0)),
                pl.BlockSpec((1, d_model), lambda i: (0, 0)),
                pl.BlockSpec((1, d_model), lambda i: (0, 0)),
            ],
            out_specs=pl.BlockSpec((tile_rows, d_model), lambda i: (i, 0)),
        ),
        compiler_params=pltpu.CompilerParams(
            dimension_semantics=("parallel",),  # shard rows across v7x's 2 TCs
            vmem_limit_bytes=vmem_limit,
        ),
    )(x2, alpha2, bias2)

    return out2.reshape(orig_shape)


def _reference(x, alpha, bias, eps):
    mean = jnp.mean(x, axis=-1, keepdims=True)
    std = jnp.std(x, axis=-1, keepdims=True, ddof=1)  # torch.std: unbiased
    return alpha * (x - mean) / (std + eps) + bias


if __name__ == "__main__":
    key = jax.random.PRNGKey(0)
    kx, ka, kb, kx2 = jax.random.split(key, 4)

    # Case 1: small BERT-like shape; rows = 18 is not a multiple of the sublane
    # packing, exercising the single-full-block path; d_model = 128 is lane-dense.
    batch, seq, d_model = 2, 9, 128
    x = jax.random.normal(kx, (batch, seq, d_model), dtype=jnp.float32)
    alpha = jnp.ones((d_model,), jnp.float32) + 0.05 * jax.random.normal(ka, (d_model,), jnp.float32)
    bias = jnp.zeros((d_model,), jnp.float32) + 0.05 * jax.random.normal(kb, (d_model,), jnp.float32)

    out = norm_forward(x, alpha, bias, eps=1e-6)
    out = jax.block_until_ready(out)
    ref = _reference(x, alpha, bias, 1e-6)
    assert out.shape == x.shape
    assert jnp.allclose(out, ref, atol=1e-4, rtol=1e-4), "case 1 mismatch vs reference"

    # Case 2: force a multi-tile ragged grid (148 rows, tile_rows=16 -> 10 tiles,
    # last tile partially out of bounds) to exercise the no-pad / no-slice path.
    x2 = jax.random.normal(kx2, (4, 37, d_model), dtype=jnp.float32)
    out2 = norm_forward(x2, alpha, bias, eps=1e-6, tile_rows=16)
    out2 = jax.block_until_ready(out2)
    ref2 = _reference(x2, alpha, bias, 1e-6)
    assert out2.shape == x2.shape
    assert jnp.allclose(out2, ref2, atol=1e-4, rtol=1e-4), "case 2 mismatch vs reference"

    print("KERNEL_OK")
</pallas_src>

<mosaic_0001>
module attributes {stable_mosaic.version = 11 : i64} {
  func.func @_norm_kernel(%arg0: i32, %arg1: memref<18x128xf32, #tpu.memory_space<vmem>>, %arg2: memref<1x128xf32, #tpu.memory_space<vmem>>, %arg3: memref<1x128xf32, #tpu.memory_space<vmem>>, %arg4: memref<18x128xf32, #tpu.memory_space<vmem>>) attributes {dimension_semantics = [#tpu.dimension_semantics<parallel>], iteration_bounds = array<i64: 1>, scalar_prefetch = 0 : i64, scratch_operands = 0 : i64, tpu.core_type = #tpu.core_type<tc>, window_params = [{transform_indices = @transform_0, window_bounds = array<i64: 18, 128>}, {pipeline_mode = #tpu.pipeline_mode<synchronous>, transform_indices = @transform_1, window_bounds = array<i64: 1, 128>}, {pipeline_mode = #tpu.pipeline_mode<synchronous>, transform_indices = @transform_2, window_bounds = array<i64: 1, 128>}, {transform_indices = @transform_3, window_bounds = array<i64: 18, 128>}]} {
    %c0 = arith.constant 0 : index
    %c0_0 = arith.constant 0 : index
    %0 = vector.load %arg1[%c0, %c0_0] : memref<18x128xf32, #tpu.memory_space<vmem>>, vector<18x128xf32>
    %cst = arith.constant dense<0.000000e+00> : vector<18xf32>
    %1 = vector.multi_reduction <add>, %0, %cst [1] : vector<18x128xf32> to vector<18xf32>
    %2 = vector.shape_cast %1 : vector<18xf32> to vector<18x1xf32>
    %cst_1 = arith.constant 1.280000e+02 : f32
    %3 = vector.broadcast %cst_1 : f32 to vector<18x1xf32>
    %4 = arith.divf %2, %3 : vector<18x1xf32>
    %5 = vector.broadcast %4 : vector<18x1xf32> to vector<18x128xf32>
    %6 = arith.subf %0, %5 : vector<18x128xf32>
    %7 = arith.mulf %6, %6 : vector<18x128xf32>
    %cst_2 = arith.constant dense<0.000000e+00> : vector<18xf32>
    %8 = vector.multi_reduction <add>, %7, %cst_2 [1] : vector<18x128xf32> to vector<18xf32>
    %9 = vector.shape_cast %8 : vector<18xf32> to vector<18x1xf32>
    %cst_3 = arith.constant 0.00787401571 : f32
    %10 = vector.broadcast %cst_3 : f32 to vector<18x1xf32>
    %11 = arith.mulf %9, %10 : vector<18x1xf32>
    %12 = math.sqrt %11 : vector<18x1xf32>
    %cst_4 = arith.constant 9.99999997E-7 : f32
    %13 = vector.broadcast %cst_4 : f32 to vector<18x1xf32>
    %14 = arith.addf %12, %13 : vector<18x1xf32>
    %cst_5 = arith.constant 1.000000e+00 : f32
    %15 = vector.broadcast %cst_5 : f32 to vector<18x1xf32>
    %16 = arith.divf %15, %14 : vector<18x1xf32>
    %c0_6 = arith.constant 0 : index
    %c0_7 = arith.constant 0 : index
    %17 = vector.load %arg2[%c0_6, %c0_7] : memref<1x128xf32, #tpu.memory_space<vmem>>, vector<1x128xf32>
    %c0_8 = arith.constant 0 : index
    %c0_9 = arith.constant 0 : index
    %18 = vector.load %arg3[%c0_8, %c0_9] : memref<1x128xf32, #tpu.memory_space<vmem>>, vector<1x128xf32>
    %19 = vector.broadcast %17 : vector<1x128xf32> to vector<18x128xf32>
    %20 = vector.broadcast %16 : vector<18x1xf32> to vector<18x128xf32>
    %21 = arith.mulf %19, %20 : vector<18x128xf32>
    %22 = arith.mulf %6, %21 : vector<18x128xf32>
    %23 = vector.broadcast %18 : vector<1x128xf32> to vector<18x128xf32>
    %24 = arith.addf %22, %23 : vector<18x128xf32>
    %c0_10 = arith.constant 0 : index
    %c0_11 = arith.constant 0 : index
    %25 = vector.load %arg4[%c0_10, %c0_11] : memref<18x128xf32, #tpu.memory_space<vmem>>, vector<18x128xf32>
    tpu.vector_store %arg4[%c0_10, %c0_11], %24 {strides = array<i32>} : memref<18x128xf32, #tpu.memory_space<vmem>>, vector<18x128xf32>,
    return
  }
  func.func @transform_0(%arg0: i32) -> (i32, i32) {
    %c0_i32 = arith.constant 0 : i32
    %c0_i32_0 = arith.constant 0 : i32
    return %arg0, %c0_i32 : i32, i32
  }
  func.func @transform_1(%arg0: i32) -> (i32, i32) {
    %c0_i32 = arith.constant 0 : i32
    %c0_i32_0 = arith.constant 0 : i32
    %c0_i32_1 = arith.constant 0 : i32
    return %c0_i32, %c0_i32_0 : i32, i32
  }
  func.func @transform_2(%arg0: i32) -> (i32, i32) {
    %c0_i32 = arith.constant 0 : i32
    %c0_i32_0 = arith.constant 0 : i32
    %c0_i32_1 = arith.constant 0 : i32
    return %c0_i32, %c0_i32_0 : i32, i32
  }
  func.func @transform_3(%arg0: i32) -> (i32, i32) {
    %c0_i32 = arith.constant 0 : i32
    %c0_i32_0 = arith.constant 0 : i32
    return %arg0, %c0_i32 : i32, i32
  }
}

</mosaic_0001>

<llo_original>
// kernel: tpu_custom_call.1
$region0: #{tpu_custom_call.1}
  #allocation0 [shape = 'u32[]', space=smem, size = 0x4, offset = 0x4, fixed_abs, tag = 'smem constant byte address 0x4 - core index']
  #allocation1 [shape = 'u32[144,128]{1,0:T(1,128)}', space=vmem, size = 0x12000, scoped, tag = 'internal scratch']
  %s0 = inlined_call_operand.hbm [shape: f32[18,128], index: 0, kind: input, shape index: {}]
  %s1 = inlined_call_operand.vmem [shape: f32[1,128], index: 1, kind: input, shape index: {}]
  %s2 = inlined_call_operand.vmem [shape: f32[1,128], index: 2, kind: input, shape index: {}]
  %s3 = inlined_call_operand.hbm [shape: f32[18,128], index: 3, kind: output, shape index: {}]
  %s4 = sld [smem:[#allocation0]]
  $region26: #{tpu_custom_call.1} parent=0
    _
  %s6 = ssub.s32 1, %s4
  %s7 = scalar_select 0, %s6, %s4
  $region1: #{tpu_custom_call.1} parent=0
    #allocation2 [shape = 'u8[12288]{0}', space=vmem, size = 0x3000, scoped, tag = 'input window, operand 0, single buffered']
    #allocation3 [shape = 's32[1]{0}', space=sflag, size = 0x4, scoped, tag = 'scoped memory for tpu_custom_call.1']
    #allocation4 [shape = 's32[1]{0}', space=sflag, size = 0x4, scoped, tag = 'scoped memory for tpu_custom_call.1']
    #allocation5 [shape = 'u8[12288]{0}', space=vmem, size = 0x3000, scoped, tag = 'output window, operand 0, single buffered']
    %8 = vsyncpa [#allocation3], 0
    %9 = vsyncpa [#allocation4], 0
    // Predicated region
    $region2: #{tpu_custom_call.1} parent=1 // pred_check
      _
    $region3: #{tpu_custom_call.1} parent=1 // pred_check_branch
      %11 = sbr.rel (0) target = $region5
    $region4: #{tpu_custom_call.1} parent=1 // pred_region
      %s13 = ssub.s32 384, 384
      %14 = vsyncadd [#allocation3], %s13
      %s15 = sshll.u32 [#allocation2], 4
      %s16 = int_to_ptr.vmem [resolvable:$true] %s15
      %21 = dma.hbm_to_vmem [thread:$0]  %s0, 384, %s16, [#allocation3], 128, 128, 8
    $region5: #{tpu_custom_call.1} parent=1 // pred_fallthru
      _
    // Predicated region
    $region6: #{tpu_custom_call.1} parent=1 // pred_check
      _
    $region7: #{tpu_custom_call.1} parent=1 // pred_check_branch
      %23 = sbr.rel (0) target = $region9
    $region8: #{tpu_custom_call.1} parent=1 // pred_region
      _
    $region9: #{tpu_custom_call.1} parent=1 // pred_fallthru
      _
    // Predicated region
    $region10: #{tpu_custom_call.1} parent=1 // pred_check
      _
    $region11: #{tpu_custom_call.1} parent=1 // pred_check_branch
      %25 = sbr.rel (0) target = $region13
    $region12: #{tpu_custom_call.1} parent=1 // pred_region
      _
    $region13: #{tpu_custom_call.1} parent=1 // pred_fallthru
      _
    // Predicated region
    $region14: #{tpu_custom_call.1} parent=1 // pred_check
      _
    $region15: #{tpu_custom_call.1} parent=1 // pred_check_branch
      %27 = sbr.rel (0) target = $region17
    $region16: #{tpu_custom_call.1} parent=1 // pred_region
      %28 = dma.done [#allocation3], 384
    $region17: #{tpu_custom_call.1} parent=1 // pred_fallthru
      _
    %v29 = vld [vmem:[#allocation2] sm:$0xff]
    %v30 = vld [vmem:[#allocation2 + $0x8] sm:$0xff]
    %v31 = vld [vmem:[#allocation2 + $0x10] sm:$0x3]
    %32 = vadd.xlane.f32.xlu0 %v29
    %v33 = vpop.xlane.xlu0 %32
    %34 = vadd.xlane.f32.xlu0 %v30
    %v35 = vpop.xlane.xlu0 %34
    %vm36 = vcmask 1041408
    %v37 = vsel %vm36, %v31, 0.0
    %38 = vadd.xlane.f32.xlu0 %v37
    %v39 = vpop.xlane.xlu0 %38
    %v40 = vrcp.pop 128.0
    %v41 = vmul.f32 %v33, %v40
    %v42 = vmul.f32 %v35, %v40
    %v43 = vmul.f32 %v39, %v40
    %v44 = vsub.f32 %v29, %v41
    %v45 = vsub.f32 %v30, %v42
    %v46 = vsub.f32 %v31, %v43
    %v47 = vmul.f32 %v44, %v44
    %v48 = vmul.f32 %v45, %v45
    %v49 = vmul.f32 %v46, %v46
    %50 = vadd.xlane.f32.xlu0 %v47
    %v51 = vpop.xlane.xlu0 %50
    %52 = vadd.xlane.f32.xlu0 %v48
    %v53 = vpop.xlane.xlu0 %52
    %v54 = vsel %vm36, %v49, 0.0
    %55 = vadd.xlane.f32.xlu0 %v54
    %v56 = vpop.xlane.xlu0 %55
    %v57 = vmul.f32 %v51, 0.007874016
    %v58 = vmul.f32 %v53, 0.007874016
    %v59 = vmul.f32 %v56, 0.007874016
    %v60 = vrsqrt.pop %v57
    %v61 = vmul.f32 %v57, %v60
    %vm62 = vcmp.eq.f32.partialorder %v57, inf
    %v63 = vsel %vm62, %v57, %v61
    %vm64 = vcmp.eq.f32.partialorder %v57, 0.0
    %v65 = vand.u32 %v57, 2147483648
    %v66 = vsel %vm64, %v65, %v63
    %v67 = vrsqrt.pop %v58
    %v68 = vmul.f32 %v58, %v67
    %vm69 = vcmp.eq.f32.partialorder %v58, inf
    %v70 = vsel %vm69, %v58, %v68
    %vm71 = vcmp.eq.f32.partialorder %v58, 0.0
    %v72 = vand.u32 %v58, 2147483648
    %v73 = vsel %vm71, %v72, %v70
    %v74 = vrsqrt.pop %v59
    %v75 = vmul.f32 %v59, %v74
    %vm76 = vcmp.eq.f32.partialorder %v59, inf
    %v77 = vsel %vm76, %v59, %v75
    %vm78 = vcmp.eq.f32.partialorder %v59, 0.0
    %v79 = vand.u32 %v59, 2147483648
    %v80 = vsel %vm78, %v79, %v77
    %v81 = vadd.f32 %v66, 1e-06
    %v82 = vadd.f32 %v73, 1e-06
    %v83 = vadd.f32 %v80, 1e-06
    %v84 = vrcp.pop %v81
    %v85 = vmul.f32 1.0, %v84
    %v86 = vrcp.pop %v82
    %v87 = vmul.f32 1.0, %v86
    %v88 = vrcp.pop %v83
    %v89 = vmul.f32 1.0, %v88
    %v90 = vld [vmem:[%s1] sm:$0x1]
    %v91 = vld [vmem:[%s2] sm:$0x1]
    %v93 = vlaneseq
    %v94 = vshrl.u32 %v93, 7
    %v95 = vsub.s32 0, %v94
    %v96 = vrot.slane %v90, %v95
    %v98 = vmul.f32 %v96, %v85
    %v99 = vmul.f32 %v96, %v87
    %v100 = vmul.f32 %v96, %v89
    %v101 = vmul.f32 %v44, %v98
    %v102 = vmul.f32 %v45, %v99
    %v103 = vmul.f32 %v46, %v100
    %v105 = vlaneseq
    %v106 = vshrl.u32 %v105, 7
    %v107 = vsub.s32 0, %v106
    %v108 = vrot.slane %v91, %v107
    %v110 = vadd.f32 %v101, %v108
    %v111 = vadd.f32 %v102, %v108
    %v112 = vadd.f32 %v103, %v108
    %113 = vst [vmem:[#allocation5] sm:$0xff] %v110
    %114 = vst [vmem:[#allocation5 + $0x8] sm:$0xff] %v111
    %115 = vst [vmem:[#allocation5 + $0x10] sm:$0x3] %v112
    // Predicated region
    $region18: #{tpu_custom_call.1} parent=1 // pred_check
      _
    $region19: #{tpu_custom_call.1} parent=1 // pred_check_branch
      %117 = sbr.rel (0) target = $region21
    $region20: #{tpu_custom_call.1} parent=1 // pred_region
      %s119 = ssub.s32 384, 384
      %120 = vsyncadd [#allocation4], %s119
      %s121 = sshll.u32 [#allocation5], 4
      %s122 = int_to_ptr.vmem [resolvable:$true] %s121
      %127 = dma.vmem_to_hbm [thread:$0]  %s122, 384, %s3, [#allocation4], 128, 128, 8
    $region21: #{tpu_custom_call.1} parent=1 // pred_fallthru
      _
    // Predicated region
    $region22: #{tpu_custom_call.1} parent=1 // pred_check
      _
    $region23: #{tpu_custom_call.1} parent=1 // pred_check_branch
      %129 = sbr.rel (0) target = $region25
    $region24: #{tpu_custom_call.1} parent=1 // pred_region
      %130 = dma.done [#allocation4], 384
    $region25: #{tpu_custom_call.1} parent=1 // pred_fallthru
      _
    %131 = vsyncpa [#allocation3], 1
    %132 = vsyncpa [#allocation4], 1

</llo_original>
